<compile_context>
chip_gen: v5e
topology: v5e:2x2
jax: 0.10.0
libtpu: 0.0.40
codegen_flags: <defaults>
</compile_context>

<pallas_src>
import functools

import jax
import jax.numpy as jnp
from jax import lax
from jax.experimental import pallas as pl
from jax.experimental.pallas import tpu as pltpu

_T = 2.0
_EPS = 1e-7


def _vmem_limit_bytes():
    """Generation-aware scoped-VMEM limit: ~half of physical VMEM per core."""
    try:
        cap = pltpu.get_tpu_info().vmem_capacity_bytes
    except Exception:  # conservative fallback if the query is unavailable
        cap = 64 * 1024 * 1024
    return int(max(32 * 1024 * 1024, min(cap // 2, 96 * 1024 * 1024)))


def _auto_batch_tile(B, C, in_itemsize, vmem_limit):
    """Byte-budgeted batch tile, rounded to the dtype's sublane packing."""
    sublane = max(8, 32 // in_itemsize)          # 8 f32, 16 bf16, 32 int8/fp8
    if B <= sublane:
        return B                                  # full-dim block is always legal

    # Working set per batch row: 2 inputs x 2 pipeline buffers (input dtype)
    # plus ~8 f32 intermediates materialized by the kernel body.
    per_row_bytes = C * (4 * in_itemsize + 8 * 4)
    budget_rows = int((vmem_limit * 0.7) // max(per_row_bytes, 1))
    # Diminishing returns past ~4 MiB per input tile (>=85% of HBM roofline).
    cap_rows = int((4 * 1024 * 1024) // max(C * in_itemsize, 1))

    bt = min(budget_rows, cap_rows, B)
    bt = max(sublane, (bt // sublane) * sublane)

    # Guarantee >= 2 grid steps when possible so the "parallel" axis can split
    # across v7x's two TensorCores (near no-op on single-TC v5e/v6e).
    while pl.cdiv(B, bt) < 2 and bt > sublane:
        bt = max(sublane, ((bt // 2) // sublane) * sublane)
    return bt


def _kl_tile_kernel(pred_ref, label_ref, part_ref, *, batch_tile, total_rows,
                    exact_parity):
    """One batch tile -> a single (1, 1, 1) partial KL sum."""
    p = pred_ref[...].astype(jnp.float32) * 0.5        # pred / T as a multiply
    l = label_ref[...].astype(jnp.float32) * 0.5       # label / T

    # log_softmax(pred / T, axis=-1), numerically stable.
    p_max = jnp.max(p, axis=-1, keepdims=True)
    p_shift = p - p_max
    log_zp = jnp.log(jnp.sum(jnp.exp(p_shift), axis=-1, keepdims=True))
    log_predict = p_shift - log_zp

    # softmax(label / T, axis=-1)
    l_max = jnp.max(l, axis=-1, keepdims=True)
    l_shift = l - l_max
    e = jnp.exp(l_shift)
    s = jnp.sum(e, axis=-1, keepdims=True)

    if exact_parity:
        # PyTorch parity: target = softmax + 1e-7, per-element log(target).
        target = e * pl.reciprocal(s, approx=False) + _EPS
        kl = target * (jnp.log(target) - log_predict)
    else:
        # Fast path: analytic log-softmax target drops the per-element log
        # (2 instead of 3 transcendentals/element); eps kept only in the
        # multiplicative factor, reciprocal moved to the idle EUP slot.
        target = e * pl.reciprocal(s, approx=True) + _EPS
        log_target = l_shift - jnp.log(s)
        kl = target * (log_target - log_predict)

    # Tail mask (only emitted when B % batch_tile != 0): zero rows past B.
    if total_rows % batch_tile != 0:
        row = lax.broadcasted_iota(jnp.int32, kl.shape, 0)
        global_row = row + pl.program_id(0) * batch_tile
        kl = jnp.where(global_row < total_rows, kl, 0.0)

    # Finish the reduction in-kernel: sublane reduce then lane (XLU) reduce.
    row_part = jnp.sum(kl, axis=0, keepdims=True)                 # (1, C)
    part_ref[...] = jnp.sum(row_part, axis=-1, keepdims=True)[jnp.newaxis]


def kl_loss(pred, label, *, batch_tile=None, exact_parity=True):
    """KLLoss.forward(pred, label) with pred/label of shape (B, C).

    exact_parity=True reproduces PyTorch's `log(softmax + 1e-7)` exactly;
    exact_parity=False uses an analytic log-target (one fewer per-element
    transcendental) for EUP-bound regimes.
    """
    assert pred.shape == label.shape and pred.ndim == 2
    B, C = pred.shape
    in_itemsize = jnp.dtype(pred.dtype).itemsize

    vmem_limit = _vmem_limit_bytes()
    if batch_tile is None:
        batch_tile = _auto_batch_tile(B, C, in_itemsize, vmem_limit)
    assert batch_tile == B or batch_tile % 8 == 0, (
        "batch_tile must be a multiple of 8 or equal to B")
    # TODO(synk): for distillation-sized C (>= ~128K) even a sublane-row tile
    # can blow the v7x VMEM budget; a C-chunked online-softmax variant is
    # needed for that regime.

    num_tiles = pl.cdiv(B, batch_tile)

    kernel = functools.partial(
        _kl_tile_kernel,
        batch_tile=batch_tile,
        total_rows=B,
        exact_parity=exact_parity,
    )

    n_elems = B * C
    cost = pl.CostEstimate(
        flops=12 * n_elems,
        transcendentals=(3 if exact_parity else 2) * n_elems,
        bytes_accessed=2 * n_elems * in_itemsize + num_tiles * 4,
    )

    partials = pl.pallas_call(
        kernel,
        out_shape=jax.ShapeDtypeStruct((num_tiles, 1, 1), jnp.float32),
        grid_spec=pltpu.PrefetchScalarGridSpec(
            num_scalar_prefetch=0,
            grid=(num_tiles,),
            in_specs=[
                pl.BlockSpec((batch_tile, C), lambda i: (i, 0)),
                pl.BlockSpec((batch_tile, C), lambda i: (i, 0)),
            ],
            # Each grid step owns its own output block -> axis is parallel.
            out_specs=pl.BlockSpec((1, 1, 1), lambda i: (i, 0, 0)),
        ),
        compiler_params=pltpu.CompilerParams(
            dimension_semantics=("parallel",),
            vmem_limit_bytes=vmem_limit,
        ),
        cost_estimate=cost,
    )(pred, label)

    # Single fused scale: T*T / B, applied once to the tiny per-tile partials.
    return jnp.sum(partials) * jnp.float32(_T * _T / B)


def _reference_kl_loss(pred, label):
    predict = jax.nn.log_softmax(pred.astype(jnp.float32) / _T, axis=1)
    target = jax.nn.softmax(label.astype(jnp.float32) / _T, axis=1) + _EPS
    return _T * _T * jnp.sum(target * (jnp.log(target) - predict)) / pred.shape[0]


if __name__ == "__main__":
    key = jax.random.PRNGKey(0)
    k1, k2, k3, k4 = jax.random.split(key, 4)

    # Case 1: f32, auto tile (-> two parallel 16-row tiles), exact parity.
    B, C = 32, 128
    pred = jax.random.normal(k1, (B, C), dtype=jnp.float32)
    label = jax.random.normal(k2, (B, C), dtype=jnp.float32)
    ref = jax.block_until_ready(_reference_kl_loss(pred, label))
    out = jax.block_until_ready(kl_loss(pred, label))
    assert jnp.allclose(out, ref, rtol=1e-5, atol=1e-5), (out, ref)

    # Case 2: ragged batch (B=20 vs 16-row auto tile) -> cdiv grid + tail mask.
    B2, C2 = 20, 128
    pred2 = jax.random.normal(k3, (B2, C2), dtype=jnp.float32)
    label2 = jax.random.normal(k4, (B2, C2), dtype=jnp.float32)
    ref2 = jax.block_until_ready(_reference_kl_loss(pred2, label2))
    out2 = jax.block_until_ready(kl_loss(pred2, label2))
    assert jnp.allclose(out2, ref2, rtol=1e-5, atol=1e-5), (out2, ref2)

    # Case 3: bf16 inputs (half the HBM read traffic; 16-row sublane packing).
    pred_bf = pred.astype(jnp.bfloat16)
    label_bf = label.astype(jnp.bfloat16)
    ref3 = jax.block_until_ready(_reference_kl_loss(pred_bf, label_bf))
    out3 = jax.block_until_ready(kl_loss(pred_bf, label_bf))
    assert jnp.allclose(out3, ref3, rtol=1e-4, atol=1e-4), (out3, ref3)

    # Case 4: reduced-transcendental fast path (analytic log-target + approx
    # reciprocal) -- slightly relaxed tolerance vs the exact formulation.
    out4 = jax.block_until_ready(kl_loss(pred, label, exact_parity=False))
    assert jnp.allclose(out4, ref, rtol=1e-2, atol=1e-2), (out4, ref)

    print("KERNEL_OK")
</pallas_src>

<mosaic_0001>
module attributes {stable_mosaic.version = 11 : i64} {
  func.func @_kl_tile_kernel(%arg0: i32, %arg1: memref<16x128xf32, #tpu.memory_space<vmem>>, %arg2: memref<16x128xf32, #tpu.memory_space<vmem>>, %arg3: memref<1x1x1xf32, #tpu.memory_space<vmem>>) attributes {dimension_semantics = [#tpu.dimension_semantics<parallel>], iteration_bounds = array<i64: 2>, scalar_prefetch = 0 : i64, scratch_operands = 0 : i64, tpu.core_type = #tpu.core_type<tc>, window_params = [{transform_indices = @transform_0, window_bounds = array<i64: 16, 128>}, {transform_indices = @transform_1, window_bounds = array<i64: 16, 128>}, {transform_indices = @transform_2, window_bounds = array<i64: 1, 1, 1>}]} {
    %c0 = arith.constant 0 : index
    %c0_0 = arith.constant 0 : index
    %0 = vector.load %arg1[%c0, %c0_0] : memref<16x128xf32, #tpu.memory_space<vmem>>, vector<16x128xf32>
    %cst = arith.constant 5.000000e-01 : f32
    %1 = vector.broadcast %cst : f32 to vector<16x128xf32>
    %2 = arith.mulf %0, %1 : vector<16x128xf32>
    %c0_1 = arith.constant 0 : index
    %c0_2 = arith.constant 0 : index
    %3 = vector.load %arg2[%c0_1, %c0_2] : memref<16x128xf32, #tpu.memory_space<vmem>>, vector<16x128xf32>
    %cst_3 = arith.constant 5.000000e-01 : f32
    %4 = vector.broadcast %cst_3 : f32 to vector<16x128xf32>
    %5 = arith.mulf %3, %4 : vector<16x128xf32>
    %cst_4 = arith.constant dense<0xFF800000> : vector<16xf32>
    %6 = vector.multi_reduction <maximumf>, %2, %cst_4 [1] : vector<16x128xf32> to vector<16xf32>
    %7 = vector.shape_cast %6 : vector<16xf32> to vector<16x1xf32>
    %8 = vector.broadcast %7 : vector<16x1xf32> to vector<16x128xf32>
    %9 = arith.subf %2, %8 : vector<16x128xf32>
    %10 = math.exp %9 : vector<16x128xf32>
    %cst_5 = arith.constant dense<0.000000e+00> : vector<16xf32>
    %11 = vector.multi_reduction <add>, %10, %cst_5 [1] : vector<16x128xf32> to vector<16xf32>
    %12 = vector.shape_cast %11 : vector<16xf32> to vector<16x1xf32>
    %13 = math.log %12 : vector<16x1xf32>
    %14 = vector.broadcast %13 : vector<16x1xf32> to vector<16x128xf32>
    %15 = arith.subf %9, %14 : vector<16x128xf32>
    %cst_6 = arith.constant dense<0xFF800000> : vector<16xf32>
    %16 = vector.multi_reduction <maximumf>, %5, %cst_6 [1] : vector<16x128xf32> to vector<16xf32>
    %17 = vector.shape_cast %16 : vector<16xf32> to vector<16x1xf32>
    %18 = vector.broadcast %17 : vector<16x1xf32> to vector<16x128xf32>
    %19 = arith.subf %5, %18 : vector<16x128xf32>
    %20 = math.exp %19 : vector<16x128xf32>
    %cst_7 = arith.constant dense<0.000000e+00> : vector<16xf32>
    %21 = vector.multi_reduction <add>, %20, %cst_7 [1] : vector<16x128xf32> to vector<16xf32>
    %22 = vector.shape_cast %21 : vector<16xf32> to vector<16x1xf32>
    %23 = tpu.reciprocal %22 : vector<16x1xf32> -> vector<16x1xf32>
    %24 = vector.broadcast %23 : vector<16x1xf32> to vector<16x128xf32>
    %25 = arith.mulf %20, %24 : vector<16x128xf32>
    %cst_8 = arith.constant 1.000000e-07 : f32
    %26 = vector.broadcast %cst_8 : f32 to vector<16x128xf32>
    %27 = arith.addf %25, %26 : vector<16x128xf32>
    %28 = math.log %27 : vector<16x128xf32>
    %29 = arith.subf %28, %15 : vector<16x128xf32>
    %30 = arith.mulf %27, %29 : vector<16x128xf32>
    %cst_9 = arith.constant dense<0.000000e+00> : vector<128xf32>
    %31 = vector.multi_reduction <add>, %30, %cst_9 [0] : vector<16x128xf32> to vector<128xf32>
    %32 = vector.shape_cast %31 : vector<128xf32> to vector<1x128xf32>
    %cst_10 = arith.constant dense<0.000000e+00> : vector<1xf32>
    %33 = vector.multi_reduction <add>, %32, %cst_10 [1] : vector<1x128xf32> to vector<1xf32>
    %34 = vector.shape_cast %33 : vector<1xf32> to vector<1x1xf32>
    %35 = vector.shape_cast %34 : vector<1x1xf32> to vector<1x1x1xf32>
    %c0_11 = arith.constant 0 : index
    %c0_12 = arith.constant 0 : index
    %c0_13 = arith.constant 0 : index
    %36 = vector.load %arg3[%c0_11, %c0_12, %c0_13] : memref<1x1x1xf32, #tpu.memory_space<vmem>>, vector<1x1x1xf32>
    tpu.vector_store %arg3[%c0_11, %c0_12, %c0_13], %35 {strides = array<i32>} : memref<1x1x1xf32, #tpu.memory_space<vmem>>, vector<1x1x1xf32>,
    return
  }
  func.func @transform_0(%arg0: i32) -> (i32, i32) {
    %c0_i32 = arith.constant 0 : i32
    %c0_i32_0 = arith.constant 0 : i32
    return %arg0, %c0_i32 : i32, i32
  }
  func.func @transform_1(%arg0: i32) -> (i32, i32) {
    %c0_i32 = arith.constant 0 : i32
    %c0_i32_0 = arith.constant 0 : i32
    return %arg0, %c0_i32 : i32, i32
  }
  func.func @transform_2(%arg0: i32) -> (i32, i32, i32) {
    %c0_i32 = arith.constant 0 : i32
    %c0_i32_0 = arith.constant 0 : i32
    %c0_i32_1 = arith.constant 0 : i32
    return %arg0, %c0_i32, %c0_i32_0 : i32, i32, i32
  }
}

</mosaic_0001>

<llo_original>
// kernel: tpu_custom_call.1
$region0: #{tpu_custom_call.1}
  #allocation0 [shape = 'u32[]', space=smem, size = 0x4, offset = 0x4, fixed_abs, tag = 'smem constant byte address 0x4 - core index']
  #allocation1 [shape = 'u32[72,128]{1,0:T(1,128)}', space=vmem, size = 0x9000, scoped, tag = 'internal scratch']
  %s0 = inlined_call_operand.hbm [shape: f32[32,128], index: 0, kind: input, shape index: {}]
  %s1 = inlined_call_operand.hbm [shape: f32[32,128], index: 1, kind: input, shape index: {}]
  %s2 = inlined_call_operand.vmem [shape: f32[2,1,1], index: 2, kind: output, shape index: {}]
  %s3 = sld [smem:[#allocation0]]
  $region49: #{tpu_custom_call.1} parent=0
    _
  %s5 = ssub.s32 1, %s3
  %s6 = scalar_select 0, %s5, %s3
  $region1: #{tpu_custom_call.1} parent=0
    #allocation2 [shape = 'u8[16384]{0}', space=vmem, size = 0x4000, scoped, tag = 'input window, operand 0']
    #allocation3 [shape = 's32[2]{0}', space=sflag, size = 0x8, scoped, tag = 'scoped memory for tpu_custom_call.1']
    #allocation4 [shape = 'u8[16384]{0}', space=vmem, size = 0x4000, scoped, tag = 'input window, operand 1']
    #allocation5 [shape = 's32[2]{0}', space=sflag, size = 0x8, scoped, tag = 'scoped memory for tpu_custom_call.1']
    %7 = vsyncpa [#allocation3], 0
    %s8 = scalar_lea.sflag [#allocation3], 1
    %9 = vsyncpa %s8, 0
    %10 = vsyncpa [#allocation5], 0
    %s11 = scalar_lea.sflag [#allocation5], 1
    %12 = vsyncpa %s11, 0
    loop: start=0, step=1, limit=4
    $region2: #{tpu_custom_call.1} parent=1 // loop_pre_header
      _
    $region3: #{tpu_custom_call.1} parent=1 // loop_header
      %s14 = sphi 0, %s18
      %p15 = scmp.ge.s32.totalorder %s14, 4
      %s24 = sphi 0, %s26
      %s27 = sphi 0, %s24
      %s28 = sphi 0, %s27
      %s44 = sphi 0, %s28
      %s50 = sphi 0, %s52
      %s53 = sphi 0, %s50
      %s54 = sphi 0, %s53
      %s70 = sphi 0, %s54
      %s76 = sphi 0, %s78
      %s79 = sphi 0, %s76
      %s80 = sphi 0, %s79
      %s96 = sphi 0, %s80
    $region4: #{tpu_custom_call.1} parent=1 // loop_header_branch
      %17 = sbr.rel (%p15) target = $region8
    $region5: #{tpu_custom_call.1} parent=1 // loop_body
      %s19 = ssub.s32 %s14, 1
      %s20 = ssub.s32 %s14, 2
      %s21 = sadd.s32 %s14, 1
      %s22 = ssub.s32 %s14, %s21
      %p23 = scmp.eq.s32.totalorder %s22, 0
      %s25 = sadd.s32 %s24, 1
      %s26 = scalar_select %p23, %s24, %s25
      %p29 = pneg %p23
      %p30 = scmp.eq.s32.totalorder %s14, 1
      %p31 = por %p29, %p30
      %p32 = scmp.ne.s32.totalorder %s24, %s27
      %p33 = scmp.eq.s32.totalorder %s14, 0
      %p34 = por %p32, %p33
      %p35 = scmp.ne.s32.totalorder %s24, %s27
      %p36 = scmp.eq.s32.totalorder %s19, 1
      %p37 = por %p35, %p36
      %p38 = scmp.ne.s32.totalorder %s27, %s28
      %p39 = scmp.eq.s32.totalorder %s19, 0
      %p40 = por %p38, %p39
      %p41 = scmp.ne.s32.totalorder %s27, %s28
      %p42 = scmp.eq.s32.totalorder %s20, 1
      %p43 = por %p41, %p42
      %p45 = scmp.ne.s32.totalorder %s28, %s44
      %p46 = scmp.eq.s32.totalorder %s20, 0
      %p47 = por %p45, %p46
      %s48 = ssub.s32 %s14, %s21
      %p49 = scmp.eq.s32.totalorder %s48, 0
      %s51 = sadd.s32 %s50, 1
      %s52 = scalar_select %p49, %s50, %s51
      %p55 = pneg %p49
      %p56 = scmp.eq.s32.totalorder %s14, 1
      %p57 = por %p55, %p56
      %p58 = scmp.ne.s32.totalorder %s50, %s53
      %p59 = scmp.eq.s32.totalorder %s14, 0
      %p60 = por %p58, %p59
      %p61 = scmp.ne.s32.totalorder %s50, %s53
      %p62 = scmp.eq.s32.totalorder %s19, 1
      %p63 = por %p61, %p62
      %p64 = scmp.ne.s32.totalorder %s53, %s54
      %p65 = scmp.eq.s32.totalorder %s19, 0
      %p66 = por %p64, %p65
      %p67 = scmp.ne.s32.totalorder %s53, %s54
      %p68 = scmp.eq.s32.totalorder %s20, 1
      %p69 = por %p67, %p68
      %p71 = scmp.ne.s32.totalorder %s54, %s70
      %p72 = scmp.eq.s32.totalorder %s20, 0
      %p73 = por %p71, %p72
      %s74 = ssub.s32 %s14, %s21
      %p75 = scmp.eq.s32.totalorder %s74, 0
      %s77 = sadd.s32 %s76, 1
      %s78 = scalar_select %p75, %s76, %s77
      %p81 = pneg %p75
      %p82 = scmp.eq.s32.totalorder %s14, 1
      %p83 = por %p81, %p82
      %p84 = scmp.ne.s32.totalorder %s76, %s79
      %p85 = scmp.eq.s32.totalorder %s14, 0
      %p86 = por %p84, %p85
      %p87 = scmp.ne.s32.totalorder %s76, %s79
      %p88 = scmp.eq.s32.totalorder %s19, 1
      %p89 = por %p87, %p88
      %p90 = scmp.ne.s32.totalorder %s79, %s80
      %p91 = scmp.eq.s32.totalorder %s19, 0
      %p92 = por %p90, %p91
      %p93 = scmp.ne.s32.totalorder %s79, %s80
      %p94 = scmp.eq.s32.totalorder %s20, 1
      %p95 = por %p93, %p94
      %p97 = scmp.ne.s32.totalorder %s80, %s96
      %p98 = scmp.eq.s32.totalorder %s20, 0
      %p99 = por %p97, %p98
      %p100 = scmp.le.s32.totalorder 1, %s14
      %p101 = scmp.lt.s32.totalorder %s14, 3
      %p102 = pnand %p100, %p101
      %p103 = pneg %p102
      // Predicated region
      $region9: #{tpu_custom_call.1} parent=5 // pred_check
        _
      $region10: #{tpu_custom_call.1} parent=5 // pred_check_branch
        %105 = sbr.rel (%p102) target = $region12
      $region11: #{tpu_custom_call.1} parent=5 // pred_region
        %s106 = ssub.s32 %s14, 1
      $region12: #{tpu_custom_call.1} parent=5 // pred_fallthru
        _
      %p107 = scmp.lt.s32.totalorder %s14, 2
      // Predicated region
      $region13: #{tpu_custom_call.1} parent=5 // pred_check
        %p108 = pneg %p107
      $region14: #{tpu_custom_call.1} parent=5 // pred_check_branch
        %110 = sbr.rel (%p108) target = $region16
      $region15: #{tpu_custom_call.1} parent=5 // pred_region
        // Predicated region
        $region17: #{tpu_custom_call.1} parent=15 // pred_check
          %p111 = pneg %p34
        $region18: #{tpu_custom_call.1} parent=15 // pred_check_branch
          %113 = sbr.rel (%p111) target = $region20
        $region19: #{tpu_custom_call.1} parent=15 // pred_region
          %s114 = sand.u32 %s24, 1
          %s115 = scalar_lea.sflag [#allocation3], %s114
          %s116 = sand.u32 %s24, 1
          %s117 = smul.addr %s116, 16
          %s118 = scalar_lea.vmem [#allocation2], %s117
          %s119 = smul.u32 2, %s14
          %121 = vsyncadd %s115, 0
          %s122 = smul.addr %s119, 8
          %s123 = scalar_lea.hbm %s0, %s122
          %s124 = sshll.u32 %s123, 4
          %s125 = int_to_ptr.hbm [resolvable:$true] %s124
          %s126 = sshll.u32 %s118, 4
          %s127 = int_to_ptr.vmem [resolvable:$true] %s126
          %132 = dma.hbm_to_vmem [thread:$0]  %s125, 256, %s127, %s115, 128, 128, 8
        $region20: #{tpu_custom_call.1} parent=15 // pred_fallthru
          _
        // Predicated region
        $region21: #{tpu_custom_call.1} parent=15 // pred_check
          %p133 = pneg %p60
        $region22: #{tpu_custom_call.1} parent=15 // pred_check_branch
          %135 = sbr.rel (%p133) target = $region24
        $region23: #{tpu_custom_call.1} parent=15 // pred_region
          %s136 = sand.u32 %s50, 1
          %s137 = scalar_lea.sflag [#allocation5], %s136
          %s138 = sand.u32 %s50, 1
          %s139 = smul.addr %s138, 16
          %s140 = scalar_lea.vmem [#allocation4], %s139
          %s141 = smul.u32 2, %s14
          %143 = vsyncadd %s137, 0
          %s144 = smul.addr %s141, 8
          %s145 = scalar_lea.hbm %s1, %s144
          %s146 = sshll.u32 %s145, 4
          %s147 = int_to_ptr.hbm [resolvable:$true] %s146
          %s148 = sshll.u32 %s140, 4
          %s149 = int_to_ptr.vmem [resolvable:$true] %s148
          %154 = dma.hbm_to_vmem [thread:$0]  %s147, 256, %s149, %s137, 128, 128, 8
        $region24: #{tpu_custom_call.1} parent=15 // pred_fallthru
          _
      $region16: #{tpu_custom_call.1} parent=5 // pred_fallthru
        _
      %p155 = scmp.le.s32.totalorder 1, %s14
      %p156 = scmp.lt.s32.totalorder %s14, 3
      %p157 = pnand %p155, %p156
      %p158 = pneg %p157
      // Predicated region
      $region25: #{tpu_custom_call.1} parent=5 // pred_check
        _
      $region26: #{tpu_custom_call.1} parent=5 // pred_check_branch
        %160 = sbr.rel (%p157) target = $region28
      $region27: #{tpu_custom_call.1} parent=5 // pred_region
        %s161 = ssub.s32 %s14, 1
        %s162 = sand.u32 %s27, 1
        %s163 = scalar_lea.sflag [#allocation3], %s162
        %s164 = sand.u32 %s27, 1
        %s165 = smul.addr %s164, 16
        %s166 = scalar_lea.vmem [#allocation2], %s165
        // Predicated region
        $region29: #{tpu_custom_call.1} parent=27 // pred_check
          %p167 = pneg %p40
        $region30: #{tpu_custom_call.1} parent=27 // pred_check_branch
          %169 = sbr.rel (%p167) target = $region32
        $region31: #{tpu_custom_call.1} parent=27 // pred_region
          %171 = dma.done %s163, 256
        $region32: #{tpu_custom_call.1} parent=27 // pred_fallthru
          _
        %s172 = sand.u32 %s53, 1
        %s173 = scalar_lea.sflag [#allocation5], %s172
        %s174 = sand.u32 %s53, 1
        %s175 = smul.addr %s174, 16
        %s176 = scalar_lea.vmem [#allocation4], %s175
        // Predicated region
        $region33: #{tpu_custom_call.1} parent=27 // pred_check
          %p177 = pneg %p66
        $region34: #{tpu_custom_call.1} parent=27 // pred_check_branch
          %179 = sbr.rel (%p177) target = $region36
        $region35: #{tpu_custom_call.1} parent=27 // pred_region
          %181 = dma.done %s173, 256
        $region36: #{tpu_custom_call.1} parent=27 // pred_fallthru
          _
        %s182 = sand.u32 %s27, 1
        %s183 = scalar_lea.sflag [#allocation3], %s182
        %s184 = sand.u32 %s27, 1
        %s185 = smul.addr %s184, 16
        %s186 = scalar_lea.vmem [#allocation2], %s185
        %p187 = pneg %p40
        %p188 = pneg %p37
        %s189 = sand.u32 %s53, 1
        %s190 = scalar_lea.sflag [#allocation5], %s189
        %s191 = sand.u32 %s53, 1
        %s192 = smul.addr %s191, 16
        %s193 = scalar_lea.vmem [#allocation4], %s192
        %p194 = pneg %p66
        %p195 = pneg %p63
        %p196 = pneg %p92
        %p197 = pneg %p89
        %p198 = scmp.lt.s32.totalorder %s19, 1
        %s199 = scalar_select %p198, %s19, 1
        %s200 = scalar_lea.vmem %s2, %s199
        %s201 = smul.u32 2, %s19
        %s202 = smul.u32 2, %s19
        %p203 = scmp.lt.s32.totalorder %s19, 1
        %s204 = scalar_select %p203, %s19, 1
        %s205 = scalar_lea.vmem %s2, %s204
        %v206 = vld [vmem:[%s166] sm:$0xff]
        %v207 = vld [vmem:[%s166 + $0x8] sm:$0xff]
        %v208 = vmul.f32 %v206, 0.5
        %v209 = vmul.f32 %v207, 0.5
        %v210 = vld [vmem:[%s176] sm:$0xff]
        %v211 = vld [vmem:[%s176 + $0x8] sm:$0xff]
        %v212 = vmul.f32 %v210, 0.5
        %v213 = vmul.f32 %v211, 0.5
        %214 = vmax.xlane.f32.xlu0 %v208
        %v215 = vpop.xlane.xlu0 %214
        %216 = vmax.xlane.f32.xlu0 %v209
        %v217 = vpop.xlane.xlu0 %216
        %v218 = vsub.f32 %v208, %v215
        %v219 = vsub.f32 %v209, %v217
        %v220 = vmul.f32 %v218, 1.442695
        %v221 = vpow.pop %v220
        %v222 = vmul.f32 %v219, 1.442695
        %v223 = vpow.pop %v222
        %224 = vadd.xlane.f32.xlu0 %v221
        %v225 = vpop.xlane.xlu0 %224
        %226 = vadd.xlane.f32.xlu0 %v223
        %v227 = vpop.xlane.xlu0 %226
        %v228 = vlog2.pop %v225
        %v229 = vmul.f32 %v228, 0.6931472
        %v230 = vlog2.pop %v227
        %v231 = vmul.f32 %v230, 0.6931472
        %v232 = vsub.f32 %v218, %v229
        %v233 = vsub.f32 %v219, %v231
        %234 = vmax.xlane.f32.xlu0 %v212
        %v235 = vpop.xlane.xlu0 %234
        %236 = vmax.xlane.f32.xlu0 %v213
        %v237 = vpop.xlane.xlu0 %236
        %v238 = vsub.f32 %v212, %v235
        %v239 = vsub.f32 %v213, %v237
        %v240 = vmul.f32 %v238, 1.442695
        %v241 = vpow.pop %v240
        %v242 = vmul.f32 %v239, 1.442695
        %v243 = vpow.pop %v242
        %244 = vadd.xlane.f32.xlu0 %v241
        %v245 = vpop.xlane.xlu0 %244
        %246 = vadd.xlane.f32.xlu0 %v243
        %v247 = vpop.xlane.xlu0 %246
        %v248 = vrcp.pop %v245
        %v249 = vmul.f32 %v245, %v248
        %v250 = vsub.f32 1.0, %v249
        %v251 = vmul.f32 %v248, %v250
        %v252 = vadd.f32 %v248, %v251
        %vm253 = vweird.f32 %v245
        %vm254 = vweird.f32 %v248
        %vm255 = vmor %vm253, %vm254
        %v256 = vsel %vm255, %v248, %v252
        %v257 = vand.u32 2147483647, %v245
        %vm258 = vcmp.eq.f32.partialorder %v257, 8.507059e+37
        %v259 = vand.u32 %v245, 2147483648
        %v260 = vor.u32 1.1754944e-38, %v259
        %v261 = vsel %vm258, %v260, %v256
        %v262 = vrcp.pop %v247
        %v263 = vmul.f32 %v247, %v262
        %v264 = vsub.f32 1.0, %v263
        %v265 = vmul.f32 %v262, %v264
        %v266 = vadd.f32 %v262, %v265
        %vm267 = vweird.f32 %v247
        %vm268 = vweird.f32 %v262
        %vm269 = vmor %vm267, %vm268
        %v270 = vsel %vm269, %v262, %v266
        %v271 = vand.u32 2147483647, %v247
        %vm272 = vcmp.eq.f32.partialorder %v271, 8.507059e+37
        %v273 = vand.u32 %v247, 2147483648
        %v274 = vor.u32 1.1754944e-38, %v273
        %v275 = vsel %vm272, %v274, %v270
        %v276 = vmul.f32 %v241, %v261
        %v277 = vmul.f32 %v243, %v275
        %v278 = vadd.f32 %v276, 1e-07
        %v279 = vadd.f32 %v277, 1e-07
        %v280 = vlog2.pop %v278
        %v281 = vmul.f32 %v280, 0.6931472
        %v282 = vlog2.pop %v279
        %v283 = vmul.f32 %v282, 0.6931472
        %v284 = vsub.f32 %v281, %v232
        %v285 = vsub.f32 %v283, %v233
        %v286 = vmul.f32 %v278, %v284
        %v287 = vmul.f32 %v279, %v285
        %v288 = vadd.f32 %v286, %v287
        %v289 = vrot.slane %v288, 4
        %v290 = vadd.f32 %v288, %v289
        %v291 = vrot.slane %v290, 2
        %v292 = vadd.f32 %v290, %v291
        %v293 = vrot.slane %v292, 1
        %v294 = vadd.f32 %v292, %v293
        %295 = vadd.xlane.f32.xlu0 %v294
        %v296 = vpop.xlane.xlu0 %295
        %vm297 = vcmask 0
        %298 = vst.msk [vmem:[%s205] sm:$0x1] %vm297, %v296
        %p299 = scmp.lt.s32.totalorder %s19, 1
        %s300 = scalar_select %p299, %s19, 1
        %s301 = scalar_lea.vmem %s2, %s300
        // Predicated region
        $region37: #{tpu_custom_call.1} parent=27 // pred_check
          %p302 = pneg %p89
        $region38: #{tpu_custom_call.1} parent=27 // pred_check_branch
          %304 = sbr.rel (%p302) target = $region40
        $region39: #{tpu_custom_call.1} parent=27 // pred_region
          _
        $region40: #{tpu_custom_call.1} parent=27 // pred_fallthru
          _
      $region28: #{tpu_custom_call.1} parent=5 // pred_fallthru
        _
      %p305 = scmp.le.s32.totalorder 2, %s14
      // Predicated region
      $region41: #{tpu_custom_call.1} parent=5 // pred_check
        %p306 = pneg %p305
      $region42: #{tpu_custom_call.1} parent=5 // pred_check_branch
        %308 = sbr.rel (%p306) target = $region44
      $region43: #{tpu_custom_call.1} parent=5 // pred_region
        %s309 = ssub.s32 %s14, 2
        // Predicated region
        $region45: #{tpu_custom_call.1} parent=43 // pred_check
          %p310 = pneg %p95
        $region46: #{tpu_custom_call.1} parent=43 // pred_check_branch
          %312 = sbr.rel (%p310) target = $region48
        $region47: #{tpu_custom_call.1} parent=43 // pred_region
          %p313 = scmp.lt.s32.totalorder %s20, 1
          %s314 = scalar_select %p313, %s20, 1
          %s315 = scalar_lea.vmem %s2, %s314
        $region48: #{tpu_custom_call.1} parent=43 // pred_fallthru
          _
      $region44: #{tpu_custom_call.1} parent=5 // pred_fallthru
        _
    $region6: #{tpu_custom_call.1} parent=1 // loop_footer
      %s18 = sadd.s32 1, %s14
    $region7: #{tpu_custom_call.1} parent=1 // loop_footer_branch
      %13 = sbr.rel target = $region3
    $region8: #{tpu_custom_call.1} parent=1 // loop_exit
      _
    %316 = vsyncpa [#allocation3], 1
    %s317 = scalar_lea.sflag [#allocation3], 1
    %318 = vsyncpa %s317, 1
    %319 = vsyncpa [#allocation5], 1
    %s320 = scalar_lea.sflag [#allocation5], 1
    %321 = vsyncpa %s320, 1

</llo_original>
